<compile_context>
chip_gen: v7x
topology: tpu7x:2x2x1
jax: 0.10.0
libtpu: 0.0.40
codegen_flags: <defaults>
</compile_context>

<pallas_src>
import jax
import jax.numpy as jnp
from jax.experimental import pallas as pl
from jax.experimental.pallas import tpu as pltpu


def _make_kernel(C):
    def kernel(coords_ref, x_ref, o_ref):
        # coords_ref: (1, 3,   TS)  -- x/y/z coordinate rows, output dtype
        # x_ref     : (1, C,   TS)  -- pass-through channels
        # o_ref     : (1, C+3, TS)
        o_ref[:, :C, :] = x_ref[...]        # original channels
        o_ref[:, C:, :] = coords_ref[...]   # coordinate channels (no temporaries)
    return kernel


def _vmem_capacity_bytes():
    try:
        cap = getattr(pltpu.get_tpu_info(), "vmem_capacity_bytes", None)
        if cap:
            return int(cap)
    except Exception:
        pass
    return 64 * 1024 * 1024        # conservative: v7x per-TensorCore VMEM


def _choose_spatial_tile(S, N, C, itemsize, max_step_bytes):
    """Pick TS (multiple of 128, or the full extent S) and the spatial grid size."""
    if S <= 128:
        return S, 1
    cdiv = lambda a, b: -(-a // b)
    # Double-buffered bytes per element of TS: input (C) + output (C+3) + coords (3).
    bytes_per_elem = 2 * (2 * C + 6) * itemsize
    ts_cap = max(128, max_step_bytes // bytes_per_elem)
    max_ns = cdiv(S, 128)                       # can't tile finer than 128 lanes
    ns_for_steps = cdiv(8, max(N, 1))           # aim for >= ~8 total grid steps
    ns = min(max_ns, max(cdiv(S, ts_cap), ns_for_steps))
    if (N * ns) % 2 != 0 and ns < max_ns:       # even step count for v7x megacore
        ns += 1
    ts = min(S, cdiv(cdiv(S, ns), 128) * 128)   # round tile up to 128 lanes
    if ts >= S:
        return S, 1
    return ts, cdiv(S, ts)


def add_coords_3d(x, *, max_step_bytes=4 * 1024 * 1024):
    """x: (N, C, X, Y, Z) -> (N, C+3, X, Y, Z), appending x/y/z coord channels."""
    N, C, X, Y, Z = x.shape
    S = X * Y * Z
    dt = x.dtype
    itemsize = jnp.dtype(dt).itemsize

    TS, n_s = _choose_spatial_tile(S, N, C, itemsize, max_step_bytes)

    # Flatten the spatial volume -> lane-dense last axis.
    x3 = x.reshape(N, C, S)

    # Precompute the three coordinate rows once (matches torch.linspace in f32,
    # then cast once to the output dtype so the kernel does no per-step casts).
    xs = jnp.linspace(-1.0, 1.0, X, dtype=jnp.float32)
    ys = jnp.linspace(-1.0, 1.0, Y, dtype=jnp.float32)
    zs = jnp.linspace(-1.0, 1.0, Z, dtype=jnp.float32)
    xc = jnp.broadcast_to(xs[:, None, None], (X, Y, Z)).reshape(S)
    yc = jnp.broadcast_to(ys[None, :, None], (X, Y, Z)).reshape(S)
    zc = jnp.broadcast_to(zs[None, None, :], (X, Y, Z)).reshape(S)
    coords = jnp.stack([xc, yc, zc], axis=0).astype(dt).reshape(1, 3, S)

    coords_spec = pl.BlockSpec((1, 3, TS), lambda si, n: (0, 0, si))
    in_spec = pl.BlockSpec((1, C, TS), lambda si, n: (n, 0, si))
    out_spec = pl.BlockSpec((1, C + 3, TS), lambda si, n: (n, 0, si))

    vmem_limit = min(_vmem_capacity_bytes() // 2, 32 * 1024 * 1024)
    bytes_accessed = (C * N * S + (C + 3) * N * S + 3 * S) * itemsize

    out3 = pl.pallas_call(
        _make_kernel(C),
        out_shape=jax.ShapeDtypeStruct((N, C + 3, S), dt),
        grid_spec=pltpu.PrefetchScalarGridSpec(
            num_scalar_prefetch=0,
            grid=(n_s, N),
            in_specs=[coords_spec, in_spec],
            out_specs=out_spec,
        ),
        compiler_params=pltpu.CompilerParams(
            dimension_semantics=("parallel", "parallel"),
            vmem_limit_bytes=vmem_limit),
        cost_estimate=pl.CostEstimate(
            flops=0, transcendentals=0, bytes_accessed=bytes_accessed),
    )(coords, x3)

    return out3.reshape(N, C + 3, X, Y, Z)


def _reference(x):
    N, C, X, Y, Z = x.shape
    xc = jnp.broadcast_to(
        jnp.linspace(-1.0, 1.0, X, dtype=jnp.float32)[None, None, :, None, None],
        (N, 1, X, Y, Z)).astype(x.dtype)
    yc = jnp.broadcast_to(
        jnp.linspace(-1.0, 1.0, Y, dtype=jnp.float32)[None, None, None, :, None],
        (N, 1, X, Y, Z)).astype(x.dtype)
    zc = jnp.broadcast_to(
        jnp.linspace(-1.0, 1.0, Z, dtype=jnp.float32)[None, None, None, None, :],
        (N, 1, X, Y, Z)).astype(x.dtype)
    return jnp.concatenate([x, xc, yc, zc], axis=1)


if __name__ == "__main__":
    key = jax.random.PRNGKey(0)

    # Primary case: N=2, C=4, spatial (8, 16, 8) -> S=1024 (lane-aligned).
    x = jax.random.normal(key, (2, 4, 8, 16, 8), dtype=jnp.float32)
    out = jax.block_until_ready(add_coords_3d(x))
    ref = _reference(x)
    assert out.shape == ref.shape, (out.shape, ref.shape)
    assert jnp.allclose(out, ref, atol=1e-6, rtol=0), "mismatch (aligned case)"

    # Ragged case: Y*Z and X*Y*Z not multiples of 128 -> partial last tile path.
    x2 = jax.random.normal(jax.random.PRNGKey(0), (2, 3, 6, 10, 7), dtype=jnp.float32)
    out2 = jax.block_until_ready(add_coords_3d(x2))
    ref2 = _reference(x2)
    assert out2.shape == ref2.shape, (out2.shape, ref2.shape)
    assert jnp.allclose(out2, ref2, atol=1e-6, rtol=0), "mismatch (ragged case)"

    print("KERNEL_OK")
</pallas_src>

<mosaic_0001>
module attributes {stable_mosaic.version = 11 : i64} {
  func.func @kernel(%arg0: i32, %arg1: i32, %arg2: memref<1x3x256xf32, #tpu.memory_space<vmem>>, %arg3: memref<1x4x256xf32, #tpu.memory_space<vmem>>, %arg4: memref<1x7x256xf32, #tpu.memory_space<vmem>>) attributes {dimension_semantics = [#tpu.dimension_semantics<parallel>, #tpu.dimension_semantics<parallel>], iteration_bounds = array<i64: 4, 2>, scalar_prefetch = 0 : i64, scratch_operands = 0 : i64, tpu.core_type = #tpu.core_type<tc>, window_params = [{transform_indices = @transform_0, window_bounds = array<i64: 1, 3, 256>}, {transform_indices = @transform_1, window_bounds = array<i64: 1, 4, 256>}, {transform_indices = @transform_2, window_bounds = array<i64: 1, 7, 256>}]} {
    %c0 = arith.constant 0 : index
    %c0_0 = arith.constant 0 : index
    %c0_1 = arith.constant 0 : index
    %0 = vector.load %arg3[%c0, %c0_0, %c0_1] : memref<1x4x256xf32, #tpu.memory_space<vmem>>, vector<1x4x256xf32>
    %c0_2 = arith.constant 0 : index
    %c0_3 = arith.constant 0 : index
    %c0_4 = arith.constant 0 : index
    %1 = vector.load %arg4[%c0_2, %c0_3, %c0_4] : memref<1x7x256xf32, #tpu.memory_space<vmem>>, vector<1x4x256xf32>
    tpu.vector_store %arg4[%c0_2, %c0_3, %c0_4], %0 {strides = array<i32>} : memref<1x7x256xf32, #tpu.memory_space<vmem>>, vector<1x4x256xf32>,
    %c0_5 = arith.constant 0 : index
    %c0_6 = arith.constant 0 : index
    %c0_7 = arith.constant 0 : index
    %2 = vector.load %arg2[%c0_5, %c0_6, %c0_7] : memref<1x3x256xf32, #tpu.memory_space<vmem>>, vector<1x3x256xf32>
    %c0_8 = arith.constant 0 : index
    %c4 = arith.constant 4 : index
    %c0_9 = arith.constant 0 : index
    %3 = vector.load %arg4[%c0_8, %c4, %c0_9] : memref<1x7x256xf32, #tpu.memory_space<vmem>>, vector<1x3x256xf32>
    tpu.vector_store %arg4[%c0_8, %c4, %c0_9], %2 {strides = array<i32>} : memref<1x7x256xf32, #tpu.memory_space<vmem>>, vector<1x3x256xf32>,
    return
  }
  func.func @transform_0(%arg0: i32, %arg1: i32) -> (i32, i32, i32) {
    %c0_i32 = arith.constant 0 : i32
    %c0_i32_0 = arith.constant 0 : i32
    %c0_i32_1 = arith.constant 0 : i32
    return %c0_i32, %c0_i32_0, %arg0 : i32, i32, i32
  }
  func.func @transform_1(%arg0: i32, %arg1: i32) -> (i32, i32, i32) {
    %c0_i32 = arith.constant 0 : i32
    %c0_i32_0 = arith.constant 0 : i32
    return %arg1, %c0_i32, %arg0 : i32, i32, i32
  }
  func.func @transform_2(%arg0: i32, %arg1: i32) -> (i32, i32, i32) {
    %c0_i32 = arith.constant 0 : i32
    %c0_i32_0 = arith.constant 0 : i32
    return %arg1, %c0_i32, %arg0 : i32, i32, i32
  }
}

</mosaic_0001>

<llo_original>
// kernel: tpu_custom_call.1
$region0: #{tpu_custom_call.1}
  #allocation0 [shape = 'u32[]', space=smem, size = 0x4, offset = 0x4, fixed_abs, tag = 'smem constant byte address 0x4 - core index']
  #allocation1 [shape = 'u32[144,128]{1,0:T(1,128)}', space=vmem, size = 0x12000, scoped, tag = 'internal scratch']
  %s0 = inlined_call_operand.vmem [shape: f32[1,3,1024], index: 0, kind: input, shape index: {}]
  %s1 = inlined_call_operand.hbm [shape: f32[2,4,1024], index: 1, kind: input, shape index: {}]
  %s2 = inlined_call_operand.vmem [shape: f32[2,7,1024], index: 2, kind: output, shape index: {}]
  %s3 = sld [smem:[#allocation0]]
  $region45: #{tpu_custom_call.1} parent=0
    _
  %s5 = ssub.s32 1, %s3
  %s6 = scalar_select 0, %s5, %s3
  $region1: #{tpu_custom_call.1} parent=0
    #allocation2 [shape = 'u8[8192]{0}', space=vmem, size = 0x2000, scoped, tag = 'input window, operand 1']
    #allocation3 [shape = 's32[2]{0}', space=sflag, size = 0x8, scoped, tag = 'scoped memory for tpu_custom_call.1']
    %7 = vsyncpa [#allocation3], 0
    %s8 = scalar_lea.sflag [#allocation3], 1
    %9 = vsyncpa %s8, 0
    loop: start=0, step=1, limit=10
    $region2: #{tpu_custom_call.1} parent=1 // loop_pre_header
      _
    $region3: #{tpu_custom_call.1} parent=1 // loop_header
      %s11 = sphi 0, %s15
      %p12 = scmp.ge.s32.totalorder %s11, 10
      %s18 = sphi 0, %s30
      %s19 = sphi 0, %s26
      %s20 = sphi 0, %s18
      %s21 = sphi 0, %s19
      %s22 = sphi 0, %s20
      %s23 = sphi 0, %s21
      %s33 = sphi 0, %s35
      %s36 = sphi 0, %s33
      %s37 = sphi 0, %s36
      %s53 = sphi 0, %s37
      %s61 = sphi 0, %s63
      %s64 = sphi 0, %s61
      %s65 = sphi 0, %s64
      %s81 = sphi 0, %s65
      %s89 = sphi 0, %s91
      %s92 = sphi 0, %s89
      %s93 = sphi 0, %s92
      %s109 = sphi 0, %s93
    $region4: #{tpu_custom_call.1} parent=1 // loop_header_branch
      %14 = sbr.rel (%p12) target = $region8
    $region5: #{tpu_custom_call.1} parent=1 // loop_body
      %s16 = ssub.s32 %s11, 1
      %s17 = ssub.s32 %s11, 2
      %s24 = sadd.s32 1, %s19
      %p25 = scmp.ge.s32.totalorder %s24, 2
      %s26 = scalar_select %p25, 0, %s24
      %s27 = sadd.s32 1, %s18
      %s28 = scalar_select %p25, %s27, %s18
      %p29 = scmp.ge.s32.totalorder %s28, 4
      %s30 = scalar_select %p29, 0, %s28
      %s31 = ssub.s32 %s18, %s30
      %p32 = scmp.eq.s32.totalorder %s31, 0
      %s34 = sadd.s32 %s33, 1
      %s35 = scalar_select %p32, %s33, %s34
      %p38 = pneg %p32
      %p39 = scmp.eq.s32.totalorder %s11, 7
      %p40 = por %p38, %p39
      %p41 = scmp.ne.s32.totalorder %s33, %s36
      %p42 = scmp.eq.s32.totalorder %s11, 0
      %p43 = por %p41, %p42
      %p44 = scmp.ne.s32.totalorder %s33, %s36
      %p45 = scmp.eq.s32.totalorder %s16, 7
      %p46 = por %p44, %p45
      %p47 = scmp.ne.s32.totalorder %s36, %s37
      %p48 = scmp.eq.s32.totalorder %s16, 0
      %p49 = por %p47, %p48
      %p50 = scmp.ne.s32.totalorder %s36, %s37
      %p51 = scmp.eq.s32.totalorder %s17, 7
      %p52 = por %p50, %p51
      %p54 = scmp.ne.s32.totalorder %s37, %s53
      %p55 = scmp.eq.s32.totalorder %s17, 0
      %p56 = por %p54, %p55
      %s57 = ssub.s32 %s19, %s26
      %s58 = ssub.s32 %s18, %s30
      %s59 = sor.u32 %s57, %s58
      %p60 = scmp.eq.s32.totalorder %s59, 0
      %s62 = sadd.s32 %s61, 1
      %s63 = scalar_select %p60, %s61, %s62
      %p66 = pneg %p60
      %p67 = scmp.eq.s32.totalorder %s11, 7
      %p68 = por %p66, %p67
      %p69 = scmp.ne.s32.totalorder %s61, %s64
      %p70 = scmp.eq.s32.totalorder %s11, 0
      %p71 = por %p69, %p70
      %p72 = scmp.ne.s32.totalorder %s61, %s64
      %p73 = scmp.eq.s32.totalorder %s16, 7
      %p74 = por %p72, %p73
      %p75 = scmp.ne.s32.totalorder %s64, %s65
      %p76 = scmp.eq.s32.totalorder %s16, 0
      %p77 = por %p75, %p76
      %p78 = scmp.ne.s32.totalorder %s64, %s65
      %p79 = scmp.eq.s32.totalorder %s17, 7
      %p80 = por %p78, %p79
      %p82 = scmp.ne.s32.totalorder %s65, %s81
      %p83 = scmp.eq.s32.totalorder %s17, 0
      %p84 = por %p82, %p83
      %s85 = ssub.s32 %s19, %s26
      %s86 = ssub.s32 %s18, %s30
      %s87 = sor.u32 %s85, %s86
      %p88 = scmp.eq.s32.totalorder %s87, 0
      %s90 = sadd.s32 %s89, 1
      %s91 = scalar_select %p88, %s89, %s90
      %p94 = pneg %p88
      %p95 = scmp.eq.s32.totalorder %s11, 7
      %p96 = por %p94, %p95
      %p97 = scmp.ne.s32.totalorder %s89, %s92
      %p98 = scmp.eq.s32.totalorder %s11, 0
      %p99 = por %p97, %p98
      %p100 = scmp.ne.s32.totalorder %s89, %s92
      %p101 = scmp.eq.s32.totalorder %s16, 7
      %p102 = por %p100, %p101
      %p103 = scmp.ne.s32.totalorder %s92, %s93
      %p104 = scmp.eq.s32.totalorder %s16, 0
      %p105 = por %p103, %p104
      %p106 = scmp.ne.s32.totalorder %s92, %s93
      %p107 = scmp.eq.s32.totalorder %s17, 7
      %p108 = por %p106, %p107
      %p110 = scmp.ne.s32.totalorder %s93, %s109
      %p111 = scmp.eq.s32.totalorder %s17, 0
      %p112 = por %p110, %p111
      %p113 = scmp.le.s32.totalorder 1, %s11
      %p114 = scmp.lt.s32.totalorder %s11, 9
      %p115 = pnand %p113, %p114
      %p116 = pneg %p115
      // Predicated region
      $region9: #{tpu_custom_call.1} parent=5 // pred_check
        _
      $region10: #{tpu_custom_call.1} parent=5 // pred_check_branch
        %118 = sbr.rel (%p115) target = $region12
      $region11: #{tpu_custom_call.1} parent=5 // pred_region
        %s119 = ssub.s32 %s11, 1
      $region12: #{tpu_custom_call.1} parent=5 // pred_fallthru
        _
      %p120 = scmp.lt.s32.totalorder %s11, 8
      // Predicated region
      $region13: #{tpu_custom_call.1} parent=5 // pred_check
        %p121 = pneg %p120
      $region14: #{tpu_custom_call.1} parent=5 // pred_check_branch
        %123 = sbr.rel (%p121) target = $region16
      $region15: #{tpu_custom_call.1} parent=5 // pred_region
        // Predicated region
        $region17: #{tpu_custom_call.1} parent=15 // pred_check
          %p124 = pneg %p43
        $region18: #{tpu_custom_call.1} parent=15 // pred_check_branch
          %126 = sbr.rel (%p124) target = $region20
        $region19: #{tpu_custom_call.1} parent=15 // pred_region
          %s127 = smul.u32 2, %s18
          %p128 = scmp.lt.s32.totalorder %s127, 7
          %s129 = scalar_select %p128, %s127, 7
          %s130 = smul.addr %s129, 4
          %s131 = scalar_lea.vmem %s0, %s130
          %s132 = smul.u32 2, %s18
        $region20: #{tpu_custom_call.1} parent=15 // pred_fallthru
          _
        // Predicated region
        $region21: #{tpu_custom_call.1} parent=15 // pred_check
          %p133 = pneg %p71
        $region22: #{tpu_custom_call.1} parent=15 // pred_check_branch
          %135 = sbr.rel (%p133) target = $region24
        $region23: #{tpu_custom_call.1} parent=15 // pred_region
          %s136 = sand.u32 %s61, 1
          %s137 = scalar_lea.sflag [#allocation3], %s136
          %s138 = sand.u32 %s61, 1
          %s139 = smul.addr %s138, 8
          %s140 = scalar_lea.vmem [#allocation2], %s139
          %s141 = smul.u32 2, %s18
          %s143 = ssub.s32 128, 128
          %144 = vsyncadd %s137, %s143
          %s145 = smul.addr %s19, 8
          %s146 = sadd.s32 %s141, %s145
          %s147 = smul.addr %s146, 64
          %s148 = scalar_lea.hbm %s1, %s147
          %s150 = sshll.u32 %s140, 4
          %s151 = int_to_ptr.vmem [resolvable:$true] %s150
          %153 = dma.hbm_to_vmem [thread:$0]  %s148, 128, %s151, %s137
        $region24: #{tpu_custom_call.1} parent=15 // pred_fallthru
          _
      $region16: #{tpu_custom_call.1} parent=5 // pred_fallthru
        _
      %p154 = scmp.le.s32.totalorder 1, %s11
      %p155 = scmp.lt.s32.totalorder %s11, 9
      %p156 = pnand %p154, %p155
      %p157 = pneg %p156
      // Predicated region
      $region25: #{tpu_custom_call.1} parent=5 // pred_check
        _
      $region26: #{tpu_custom_call.1} parent=5 // pred_check_branch
        %159 = sbr.rel (%p156) target = $region28
      $region27: #{tpu_custom_call.1} parent=5 // pred_region
        %s160 = ssub.s32 %s11, 1
        %s161 = sand.u32 %s64, 1
        %s162 = scalar_lea.sflag [#allocation3], %s161
        %s163 = sand.u32 %s64, 1
        %s164 = smul.addr %s163, 8
        %s165 = scalar_lea.vmem [#allocation2], %s164
        // Predicated region
        $region29: #{tpu_custom_call.1} parent=27 // pred_check
          %p166 = pneg %p77
        $region30: #{tpu_custom_call.1} parent=27 // pred_check_branch
          %168 = sbr.rel (%p166) target = $region32
        $region31: #{tpu_custom_call.1} parent=27 // pred_region
          %169 = dma.done %s162, 128
        $region32: #{tpu_custom_call.1} parent=27 // pred_fallthru
          _
        %s170 = smul.u32 2, %s20
        %p171 = scmp.lt.s32.totalorder %s170, 7
        %s172 = scalar_select %p171, %s170, 7
        %s173 = smul.addr %s172, 4
        %s174 = scalar_lea.vmem %s0, %s173
        %p175 = pneg %p49
        %p176 = pneg %p46
        %s177 = sand.u32 %s64, 1
        %s178 = scalar_lea.sflag [#allocation3], %s177
        %s179 = sand.u32 %s64, 1
        %s180 = smul.addr %s179, 8
        %s181 = scalar_lea.vmem [#allocation2], %s180
        %p182 = pneg %p77
        %p183 = pneg %p74
        %p184 = pneg %p105
        %p185 = pneg %p102
        %s186 = smul.u32 2, %s20
        %p187 = scmp.lt.s32.totalorder %s21, 1
        %s188 = scalar_select %p187, %s21, 1
        %p189 = scmp.lt.s32.totalorder %s186, 7
        %s190 = scalar_select %p189, %s186, 7
        %s191 = smul.addr %s188, 8
        %s192 = sadd.s32 %s190, %s191
        %s193 = smul.addr %s192, 8
        %s194 = scalar_lea.vmem %s2, %s193
        %s195 = smul.u32 2, %s20
        %p196 = scmp.lt.s32.totalorder %s195, 7
        %s197 = scalar_select %p196, %s195, 7
        %s198 = smul.addr %s197, 4
        %s199 = scalar_lea.vmem %s0, %s198
        %s200 = smul.u32 2, %s20
        %s201 = smul.u32 2, %s20
        %s202 = smul.u32 2, %s20
        %p203 = scmp.lt.s32.totalorder %s21, 1
        %s204 = scalar_select %p203, %s21, 1
        %p205 = scmp.lt.s32.totalorder %s202, 7
        %s206 = scalar_select %p205, %s202, 7
        %s207 = smul.addr %s204, 8
        %s208 = sadd.s32 %s206, %s207
        %s209 = smul.addr %s208, 8
        %s210 = scalar_lea.vmem %s2, %s209
        %s211 = smul.u32 2, %s20
        %v212 = vld [vmem:[%s165] sm:$0xff]
        %v214 = vcombine.high %v212, %v212
        %216 = vst [vmem:[%s210] sm:$0xf] %v212
        %217 = vst [vmem:[%s210 + $0x8] sm:$0xf] %v214
        %v218 = vld [vmem:[%s199] sm:$0x77]
        %v220 = vcombine.low %v218, %v218
        %222 = vst [vmem:[%s210] sm:$0x70] %v220
        %223 = vst [vmem:[%s210 + $0x8] sm:$0x70] %v218
        %s224 = smul.u32 2, %s20
        %p225 = scmp.lt.s32.totalorder %s21, 1
        %s226 = scalar_select %p225, %s21, 1
        %p227 = scmp.lt.s32.totalorder %s224, 7
        %s228 = scalar_select %p227, %s224, 7
        %s229 = smul.addr %s226, 8
        %s230 = sadd.s32 %s228, %s229
        %s231 = smul.addr %s230, 8
        %s232 = scalar_lea.vmem %s2, %s231
        // Predicated region
        $region33: #{tpu_custom_call.1} parent=27 // pred_check
          %p233 = pneg %p102
        $region34: #{tpu_custom_call.1} parent=27 // pred_check_branch
          %235 = sbr.rel (%p233) target = $region36
        $region35: #{tpu_custom_call.1} parent=27 // pred_region
          %s236 = smul.u32 2, %s20
        $region36: #{tpu_custom_call.1} parent=27 // pred_fallthru
          _
      $region28: #{tpu_custom_call.1} parent=5 // pred_fallthru
        _
      %p237 = scmp.le.s32.totalorder 2, %s11
      // Predicated region
      $region37: #{tpu_custom_call.1} parent=5 // pred_check
        %p238 = pneg %p237
      $region38: #{tpu_custom_call.1} parent=5 // pred_check_branch
        %240 = sbr.rel (%p238) target = $region40
      $region39: #{tpu_custom_call.1} parent=5 // pred_region
        %s241 = ssub.s32 %s11, 2
        // Predicated region
        $region41: #{tpu_custom_call.1} parent=39 // pred_check
          %p242 = pneg %p108
        $region42: #{tpu_custom_call.1} parent=39 // pred_check_branch
          %244 = sbr.rel (%p242) target = $region44
        $region43: #{tpu_custom_call.1} parent=39 // pred_region
          %s245 = smul.u32 2, %s22
          %p246 = scmp.lt.s32.totalorder %s23, 1
          %s247 = scalar_select %p246, %s23, 1
          %p248 = scmp.lt.s32.totalorder %s245, 7
          %s249 = scalar_select %p248, %s245, 7
          %s250 = smul.addr %s247, 8
          %s251 = sadd.s32 %s249, %s250
          %s252 = smul.addr %s251, 8
          %s253 = scalar_lea.vmem %s2, %s252
        $region44: #{tpu_custom_call.1} parent=39 // pred_fallthru
          _
      $region40: #{tpu_custom_call.1} parent=5 // pred_fallthru
        _
    $region6: #{tpu_custom_call.1} parent=1 // loop_footer
      %s15 = sadd.s32 1, %s11
    $region7: #{tpu_custom_call.1} parent=1 // loop_footer_branch
      %10 = sbr.rel target = $region3
    $region8: #{tpu_custom_call.1} parent=1 // loop_exit
      _
    %254 = vsyncpa [#allocation3], 1
    %s255 = scalar_lea.sflag [#allocation3], 1
    %256 = vsyncpa %s255, 1

</llo_original>
